<compile_context>
chip_gen: v7x
topology: tpu7x:2x2x1
jax: 0.10.0
libtpu: 0.0.40
codegen_flags: <defaults>
</compile_context>

<pallas_src>
import math

import jax
import jax.numpy as jnp
import numpy as np
from jax.experimental import pallas as pl
from jax.experimental.pallas import tpu as pltpu

NUM_HEAD = 4
LN_EPS = 1e-5                       # torch nn.LayerNorm default

# bf16 on every MXU path (f32 accumulation via preferred_element_type, f32
# LayerNorm/softmax statistics).  Set to jnp.float32 for bit-accurate debugging.
MXU_DTYPE = jnp.bfloat16
# Activation I/O dtype for the attention kernel.  Set to jnp.bfloat16 if the
# surrounding model accepts bf16 activations (halves HBM traffic per step).
ACT_IO_DTYPE = jnp.float32
# Approximate EUP reciprocal for the softmax denominator (~1e-3 relative error,
# fine for bf16 inference).  Off by default so results track an f32 reference.
APPROX_RECIPROCAL = False


# ------------------------------ VMEM budgeting ------------------------------ #

def _vmem_capacity_bytes():
    try:
        info = pltpu.get_tpu_info()
        cap = getattr(info, "vmem_capacity_bytes", None)
        if cap:
            return int(cap)
    except Exception:
        pass
    return 64 * 1024 * 1024          # conservative default: v7x per-TC capacity


def _vmem_limit_bytes():
    cap = _vmem_capacity_bytes()
    # Leave headroom below physical capacity for compiler scratch / spills:
    # ~54 MiB on v7x (64 MiB), ~109 MiB on v5e/v6e (128 MiB).
    return max(32 << 20, min(int(0.85 * cap), cap - (8 << 20)))


def _round_up(x, m):
    return ((x + m - 1) // m) * m


# ------------------------------ spec helpers ------------------------------- #

_SINGLE_BUFFER_OK = None


def _single_buffer_supported():
    """Probe whether pl.Buffered(1) const-input specs compile AND are correct."""
    global _SINGLE_BUFFER_OK
    if _SINGLE_BUFFER_OK is not None:
        return _SINGLE_BUFFER_OK
    if not hasattr(pl, "Buffered"):
        _SINGLE_BUFFER_OK = False
        return False
    try:
        c = jnp.arange(8 * 128, dtype=jnp.float32).reshape(8, 128)
        x = jnp.arange(16 * 128, dtype=jnp.float32).reshape(16, 128)

        def probe(c_ref, x_ref, o_ref):
            o_ref[...] = x_ref[...] + c_ref[...]

        y = pl.pallas_call(
            probe,
            out_shape=jax.ShapeDtypeStruct((16, 128), jnp.float32),
            grid=(2,),
            in_specs=[
                pl.BlockSpec((8, 128), lambda i: (0, 0),
                             pipeline_mode=pl.Buffered(1)),
                pl.BlockSpec((8, 128), lambda i: (i, 0)),
            ],
            out_specs=pl.BlockSpec((8, 128), lambda i: (i, 0)),
        )(c, x)
        y = np.asarray(jax.block_until_ready(y))
        expected = np.asarray(x) + np.concatenate([np.asarray(c)] * 2, axis=0)
        _SINGLE_BUFFER_OK = bool(np.allclose(y, expected))
    except Exception:
        # The probe kernel is trivially correct by construction; any failure
        # here means Buffered(1) is unsupported on this jax/libtpu build.
        _SINGLE_BUFFER_OK = False
    return _SINGLE_BUFFER_OK


def _const_spec(block_shape, single_buffer):
    """BlockSpec for grid-constant inputs; single-buffered when supported."""
    index_map = lambda *_: (0,) * len(block_shape)
    if single_buffer:
        return pl.BlockSpec(block_shape, index_map, pipeline_mode=pl.Buffered(1))
    return pl.BlockSpec(block_shape, index_map)


def _pick_flat_tile(n2, pair_dim, num_head, budget_bytes):
    """Lane-dense tile (multiple of 128) for the flattened pair-bias kernel."""
    out_b = np.dtype(MXU_DTYPE).itemsize
    # Per flattened row: double-buffered f32 input + double-buffered lane-dense
    # output + f32 LayerNorm intermediates.
    per_row = 2 * pair_dim * 4 + 2 * num_head * out_b + 3 * pair_dim * 4
    cap = max(128, (budget_bytes // max(per_row, 1)) // 128 * 128)
    tile = min(cap, 8192, _round_up(n2, 128))
    return max(128, (tile // 128) * 128)


def _pick_row_block(n_seq, n_res, msa_dim, num_head, nb_itemsize, nb_buffers,
                    budget_bytes):
    """Rows per grid step, sized off the true per-step VMEM live set."""
    head_dim = msa_dim // num_head
    mxu_b = np.dtype(MXU_DTYPE).itemsize
    act_b = np.dtype(ACT_IO_DTYPE).itemsize

    def est(rows):
        m = rows * n_res
        # double-buffered msa in + out blocks + mask block
        io = 2 * (m * msa_dim * act_b + m * msa_dim * act_b
                  + rows * max(n_res, 128) * 4)
        # resident pair bias (single- or double-buffered) + weights + LN params
        nb = nb_buffers * num_head * n_res * n_res * nb_itemsize
        wts = nb_buffers * (5 * msa_dim * msa_dim * mxu_b + 6 * msa_dim * 4)
        # in-kernel intermediates (f32): xn, fused qkvg, per-head logits+p,
        # per-head oh/gate_h, running accumulator
        xn = m * msa_dim * 4
        qkvg = 4 * m * msa_dim * 4
        per_head = 2 * rows * n_res * n_res * 4 + 2 * m * head_dim * 4
        acc = m * msa_dim * 4
        return io + nb + wts + xn + qkvg + per_head + acc

    # Candidates keep the (8,128) block constraint: multiples of 8 dividing
    # n_seq, or the full n_seq.
    cands = sorted({d for d in range(8, n_seq, 8) if n_seq % d == 0} | {n_seq})
    fitting = [c for c in cands if est(c) <= budget_bytes]
    multi = [c for c in fitting if c < n_seq]   # >=2 grid steps preferred
    if multi:
        return max(multi)
    if fitting:
        return fitting[-1]
    return cands[0]


# ------------------------------ Pallas kernels ------------------------------ #

def _pair_bias_kernel(pair_ref, ln_s_ref, ln_b_ref, w2dt_ref, out_ref):
    # pair_ref : [TILE, pair_dim] (flattened (q,k) rows), out_ref: [H, TILE]
    x = pair_ref[...].astype(jnp.float32)
    mean = jnp.mean(x, axis=-1, keepdims=True)
    var = jnp.mean(jnp.square(x - mean), axis=-1, keepdims=True)
    xn = (x - mean) * jax.lax.rsqrt(var + LN_EPS) * ln_s_ref[...] + ln_b_ref[...]
    # [H, pair_dim] x [TILE, pair_dim] contracting pair_dim -> [H, TILE]
    out_ref[...] = jax.lax.dot_general(
        w2dt_ref[...], xn.astype(w2dt_ref.dtype), (((1,), (1,)), ((), ())),
        preferred_element_type=jnp.float32).astype(out_ref.dtype)


def _msa_row_attn_kernel(msa_ref, mask_ref, nb_ref,
                         qn_s_ref, qn_b_ref,
                         w_qkvg_ref, bg_ref, wo_ref, bo_ref,
                         out_ref):
    # msa_ref  : [R*N_res, msa_dim]   block of R MSA rows (flattened)
    # mask_ref : [R, N_res]
    # nb_ref   : [H, N_res, N_res]    pair bias (bf16, shared, single-buffered)
    num_rows, n_res = mask_ref.shape
    num_head = nb_ref.shape[0]
    m_rows, msa_dim = msa_ref.shape
    head_dim = msa_dim // num_head
    mxu_dt = w_qkvg_ref.dtype

    # query_norm (LayerNorm over msa_dim), statistics in f32
    x = msa_ref[...].astype(jnp.float32)
    mean = jnp.mean(x, axis=-1, keepdims=True)
    var = jnp.mean(jnp.square(x - mean), axis=-1, keepdims=True)
    xn = (x - mean) * jax.lax.rsqrt(var + LN_EPS) * qn_s_ref[...] + qn_b_ref[...]

    # Fused Q/K/V/gate projection: one long MXU push, f32 accumulation.
    # (1/sqrt(head_dim) is folded into the Q columns host-side.)
    qkvg = jnp.dot(xn.astype(mxu_dt), w_qkvg_ref[...],
                   preferred_element_type=jnp.float32)
    q = qkvg[:, 0 * msa_dim:1 * msa_dim]
    k = qkvg[:, 1 * msa_dim:2 * msa_dim]
    v = qkvg[:, 2 * msa_dim:3 * msa_dim]
    gate = jax.nn.sigmoid(qkvg[:, 3 * msa_dim:4 * msa_dim] + bg_ref[...])

    # mask bias hoisted once per grid step: [R, 1, N_res]
    mask_bias = (1e9 * (mask_ref[...].astype(jnp.float32) - 1.0))[:, None, :]

    # Per-head attention with output-projection accumulation: each head's
    # logits/p/oh die before the next head starts; no attention scratch, no
    # masked sub-128 scratch stores.
    acc = jnp.zeros((m_rows, msa_dim), jnp.float32)
    for h in range(num_head):                               # static, small
        sl = slice(h * head_dim, (h + 1) * head_dim)
        qh = q[:, sl].astype(mxu_dt).reshape(num_rows, n_res, head_dim)
        kh = k[:, sl].astype(mxu_dt).reshape(num_rows, n_res, head_dim)
        vh = v[:, sl].astype(mxu_dt).reshape(num_rows, n_res, head_dim)

        # row-batched QK^T: [R, N_res, N_res], f32 accumulation
        logits = jnp.einsum('bqd,bkd->bqk', qh, kh,
                            preferred_element_type=jnp.float32)
        logits = logits + nb_ref[h].astype(jnp.float32) + mask_bias
        logits = logits - jnp.max(logits, axis=-1, keepdims=True)
        p = jnp.exp(logits)
        denom = jnp.sum(p, axis=-1, keepdims=True)

        oh = jnp.einsum('bqk,bkd->bqd', p.astype(mxu_dt), vh,
                        preferred_element_type=jnp.float32)
        if APPROX_RECIPROCAL:
            oh = oh * pl.reciprocal(denom, approx=True)
        else:
            oh = oh / denom

        gate_h = gate[:, sl].reshape(num_rows, n_res, head_dim)
        weighted = (oh * gate_h).reshape(m_rows, head_dim)
        acc = acc + jnp.dot(weighted.astype(mxu_dt), wo_ref[sl, :],
                            preferred_element_type=jnp.float32)

    out_ref[...] = (acc + bo_ref[...]).astype(out_ref.dtype)


# -------------------------------- Wrappers ---------------------------------- #

def compute_pair_bias(pair_act, ln_scale, ln_offset, w2d, single_buffer):
    n_res, _, pair_dim = pair_act.shape
    num_head = w2d.shape[1]
    n2 = n_res * n_res

    budget = min(8 << 20, _vmem_limit_bytes() // 4)
    tile = _pick_flat_tile(n2, pair_dim, num_head, budget)
    n2_pad = pl.cdiv(n2, tile) * tile

    pair2 = pair_act.reshape(n2, pair_dim)                  # free XLA reshape
    if n2_pad != n2:
        pair2 = jnp.pad(pair2, ((0, n2_pad - n2), (0, 0)))  # masked tail rows
    w2dt = jnp.transpose(w2d).astype(MXU_DTYPE)             # [H, pair_dim]

    out = pl.pallas_call(
        _pair_bias_kernel,
        out_shape=jax.ShapeDtypeStruct((num_head, n2_pad), MXU_DTYPE),
        grid=(n2_pad // tile,),
        in_specs=[
            pl.BlockSpec((tile, pair_dim), lambda i: (i, 0)),
            _const_spec((1, pair_dim), single_buffer),
            _const_spec((1, pair_dim), single_buffer),
            _const_spec((num_head, pair_dim), single_buffer),
        ],
        out_specs=pl.BlockSpec((num_head, tile), lambda i: (0, i)),
        compiler_params=pltpu.CompilerParams(
            dimension_semantics=("parallel",),
            vmem_limit_bytes=_vmem_limit_bytes()),
    )(pair2, ln_scale.astype(jnp.float32), ln_offset.astype(jnp.float32), w2dt)
    if n2_pad != n2:
        out = out[:, :n2]
    return out.reshape(num_head, n_res, n_res)              # free XLA reshape


def _attention_call(msa_act, msa_mask, nb, params, single_buffer):
    n_seq, n_res, msa_dim = msa_act.shape
    num_head = nb.shape[0]
    head_dim = msa_dim // num_head

    nb_buffers = 1 if single_buffer else 2
    rows = _pick_row_block(n_seq, n_res, msa_dim, num_head,
                           nb.dtype.itemsize, nb_buffers,
                           int(0.75 * _vmem_limit_bytes()))
    m_rows = rows * n_res

    msa2 = msa_act.reshape(n_seq * n_res, msa_dim).astype(ACT_IO_DTYPE)
    mask_f = msa_mask.astype(jnp.float32)

    # Fused projection weights: [msa_dim, 4*msa_dim] = [Wq*1/sqrt(d) | Wk | Wv | Wg]
    wq = params["q_w"] * (1.0 / math.sqrt(head_dim))
    w_qkvg = jnp.concatenate(
        [wq, params["k_w"], params["v_w"], params["gating_w"]], axis=1
    ).astype(MXU_DTYPE)
    wo = params["output_w"].astype(MXU_DTYPE)

    out2 = pl.pallas_call(
        _msa_row_attn_kernel,
        out_shape=jax.ShapeDtypeStruct((n_seq * n_res, msa_dim), ACT_IO_DTYPE),
        grid=(n_seq // rows,),
        in_specs=[
            pl.BlockSpec((m_rows, msa_dim), lambda s: (s, 0)),     # msa rows
            pl.BlockSpec((rows, n_res), lambda s: (s, 0)),         # mask rows
            _const_spec((num_head, n_res, n_res), single_buffer),  # pair bias
            _const_spec((1, msa_dim), single_buffer),              # qn scale
            _const_spec((1, msa_dim), single_buffer),              # qn offset
            _const_spec((msa_dim, 4 * msa_dim), single_buffer),    # fused W
            _const_spec((1, msa_dim), single_buffer),              # bgate
            _const_spec((msa_dim, msa_dim), single_buffer),        # Wout
            _const_spec((1, msa_dim), single_buffer),              # bout
        ],
        out_specs=pl.BlockSpec((m_rows, msa_dim), lambda s: (s, 0)),
        compiler_params=pltpu.CompilerParams(
            dimension_semantics=("parallel",),
            vmem_limit_bytes=_vmem_limit_bytes()),
    )(msa2, mask_f, nb,
      params["query_norm_scale"].astype(jnp.float32),
      params["query_norm_offset"].astype(jnp.float32),
      w_qkvg,
      params["gating_b"].astype(jnp.float32),
      wo,
      params["output_b"].astype(jnp.float32))
    return out2.reshape(n_seq, n_res, msa_dim)


def msa_row_attention_with_pair_bias(msa_act, msa_mask, pair_act, params):
    single_buffer = _single_buffer_supported()
    nb = compute_pair_bias(pair_act,
                           params["feat_2d_norm_scale"],
                           params["feat_2d_norm_offset"],
                           params["feat_2d_weights"],
                           single_buffer=single_buffer)
    return _attention_call(msa_act, msa_mask, nb, params, single_buffer)


# ----------------------------- Pure-JAX reference --------------------------- #

def reference_forward(msa_act, msa_mask, pair_act, params):
    def ln(x, s, b):
        m = jnp.mean(x, -1, keepdims=True)
        v = jnp.mean(jnp.square(x - m), -1, keepdims=True)
        return (x - m) / jnp.sqrt(v + LN_EPS) * s + b

    msa_dim = msa_act.shape[-1]
    H, hd = NUM_HEAD, msa_dim // NUM_HEAD

    bias = (1e9 * (msa_mask.astype(msa_act.dtype) - 1.0))[:, None, None, :]
    x = ln(msa_act, params["query_norm_scale"][0], params["query_norm_offset"][0])
    p = ln(pair_act, params["feat_2d_norm_scale"][0], params["feat_2d_norm_offset"][0])
    nb = jnp.einsum("qkc,ch->hqk", p, params["feat_2d_weights"])

    q = (x @ params["q_w"]) * (1.0 / math.sqrt(hd))
    k = x @ params["k_w"]
    v = x @ params["v_w"]
    q = q.reshape(q.shape[:-1] + (H, hd))
    k = k.reshape(k.shape[:-1] + (H, hd))
    v = v.reshape(v.shape[:-1] + (H, hd))

    logits = jnp.einsum("sqhd,skhd->shqk", q, k) + bias + nb[None]
    w = jax.nn.softmax(logits, axis=-1)
    wa = jnp.einsum("shqk,skhd->sqhd", w, v)

    gate = jax.nn.sigmoid(x @ params["gating_w"] + params["gating_b"][0])
    gate = gate.reshape(gate.shape[:-1] + (H, hd))
    wa = wa * gate
    wa = wa.reshape(wa.shape[:-2] + (msa_dim,))
    return wa @ params["output_w"] + params["output_b"][0]


# --------------------------------- Main ------------------------------------ #

if __name__ == "__main__":
    N_SEQ, N_RES, MSA_DIM, PAIR_DIM = 8, 16, 32, 16

    key = jax.random.PRNGKey(0)
    keys = jax.random.split(key, 12)

    msa_act = jax.random.normal(keys[0], (N_SEQ, N_RES, MSA_DIM), jnp.float32)
    pair_act = jax.random.normal(keys[1], (N_RES, N_RES, PAIR_DIM), jnp.float32)
    msa_mask = (jax.random.uniform(keys[2], (N_SEQ, N_RES)) < 0.8).astype(jnp.float32)

    def w_init(k, shape, scale):
        return scale * jax.random.normal(k, shape, jnp.float32)

    params = {
        # LayerNorm params ([1, dim] so they are >=2D for TPU VMEM tiles)
        "query_norm_scale": 1.0 + 0.1 * jax.random.normal(keys[3], (1, MSA_DIM), jnp.float32),
        "query_norm_offset": 0.1 * jax.random.normal(keys[4], (1, MSA_DIM), jnp.float32),
        "feat_2d_norm_scale": 1.0 + 0.1 * jax.random.normal(keys[5], (1, PAIR_DIM), jnp.float32),
        "feat_2d_norm_offset": 0.1 * jax.random.normal(keys[6], (1, PAIR_DIM), jnp.float32),
        # feat_2d_weights: pair_dim -> num_head, no bias
        "feat_2d_weights": w_init(keys[7], (PAIR_DIM, NUM_HEAD), 1.0 / math.sqrt(PAIR_DIM)),
        # Attention projections (no bias for q/k/v)
        "q_w": w_init(keys[8], (MSA_DIM, MSA_DIM), 1.0 / math.sqrt(MSA_DIM)),
        "k_w": w_init(keys[9], (MSA_DIM, MSA_DIM), 1.0 / math.sqrt(MSA_DIM)),
        "v_w": w_init(keys[10], (MSA_DIM, MSA_DIM), 1.0 / math.sqrt(MSA_DIM)),
        # Gating linear (AF2 'gating' init is zeros weight / ones bias; use
        # small nonzero weight to exercise the path deterministically)
        "gating_w": w_init(keys[11], (MSA_DIM, MSA_DIM), 0.05),
        "gating_b": jnp.ones((1, MSA_DIM), jnp.float32),
        # Output projection (AF2 'final' init is zeros; use small nonzero)
        "output_w": w_init(keys[0], (MSA_DIM, MSA_DIM), 0.05),
        "output_b": 0.01 * jnp.ones((1, MSA_DIM), jnp.float32),
    }

    out = msa_row_attention_with_pair_bias(msa_act, msa_mask, pair_act, params)
    out = jax.block_until_ready(out)

    ref = jax.block_until_ready(reference_forward(msa_act, msa_mask, pair_act, params))
    # Tolerance accounts for bf16 MXU operands and bf16-stored pair bias
    # (f32 accumulation / f32 LayerNorm and softmax statistics throughout).
    np.testing.assert_allclose(np.asarray(out, dtype=np.float32),
                               np.asarray(ref, dtype=np.float32),
                               rtol=2e-2, atol=2e-2)

    print("KERNEL_OK")
</pallas_src>

<mosaic_0001>
module attributes {stable_mosaic.version = 11 : i64} {
  func.func @probe(%arg0: i32, %arg1: memref<8x128xf32, #tpu.memory_space<vmem>>, %arg2: memref<8x128xf32, #tpu.memory_space<vmem>>, %arg3: memref<8x128xf32, #tpu.memory_space<vmem>>) attributes {dimension_semantics = [#tpu.dimension_semantics<arbitrary>], iteration_bounds = array<i64: 2>, scalar_prefetch = 0 : i64, scratch_operands = 0 : i64, tpu.core_type = #tpu.core_type<tc>, window_params = [{pipeline_mode = #tpu.pipeline_mode<synchronous>, transform_indices = @transform_0, window_bounds = array<i64: 8, 128>}, {transform_indices = @transform_1, window_bounds = array<i64: 8, 128>}, {transform_indices = @transform_2, window_bounds = array<i64: 8, 128>}]} {
    %c0 = arith.constant 0 : index
    %c0_0 = arith.constant 0 : index
    %0 = vector.load %arg2[%c0, %c0_0] : memref<8x128xf32, #tpu.memory_space<vmem>>, vector<8x128xf32>
    %c0_1 = arith.constant 0 : index
    %c0_2 = arith.constant 0 : index
    %1 = vector.load %arg1[%c0_1, %c0_2] : memref<8x128xf32, #tpu.memory_space<vmem>>, vector<8x128xf32>
    %2 = arith.addf %0, %1 : vector<8x128xf32>
    %c0_3 = arith.constant 0 : index
    %c0_4 = arith.constant 0 : index
    %3 = vector.load %arg3[%c0_3, %c0_4] : memref<8x128xf32, #tpu.memory_space<vmem>>, vector<8x128xf32>
    tpu.vector_store %arg3[%c0_3, %c0_4], %2 {strides = array<i32>} : memref<8x128xf32, #tpu.memory_space<vmem>>, vector<8x128xf32>,
    return
  }
  func.func @transform_0(%arg0: i32) -> (i32, i32) {
    %c0_i32 = arith.constant 0 : i32
    %c0_i32_0 = arith.constant 0 : i32
    %c0_i32_1 = arith.constant 0 : i32
    return %c0_i32, %c0_i32_0 : i32, i32
  }
  func.func @transform_1(%arg0: i32) -> (i32, i32) {
    %c0_i32 = arith.constant 0 : i32
    %c0_i32_0 = arith.constant 0 : i32
    return %arg0, %c0_i32 : i32, i32
  }
  func.func @transform_2(%arg0: i32) -> (i32, i32) {
    %c0_i32 = arith.constant 0 : i32
    %c0_i32_0 = arith.constant 0 : i32
    return %arg0, %c0_i32 : i32, i32
  }
}

module attributes {stable_mosaic.version = 11 : i64} {
  func.func @_pair_bias_kernel(%arg0: i32, %arg1: memref<256x16xf32, #tpu.memory_space<vmem>>, %arg2: memref<1x16xf32, #tpu.memory_space<vmem>>, %arg3: memref<1x16xf32, #tpu.memory_space<vmem>>, %arg4: memref<4x16xbf16, #tpu.memory_space<vmem>>, %arg5: memref<4x256xbf16, #tpu.memory_space<vmem>>) attributes {dimension_semantics = [#tpu.dimension_semantics<parallel>], iteration_bounds = array<i64: 1>, scalar_prefetch = 0 : i64, scratch_operands = 0 : i64, tpu.core_type = #tpu.core_type<tc>, window_params = [{transform_indices = @transform_0, window_bounds = array<i64: 256, 16>}, {pipeline_mode = #tpu.pipeline_mode<synchronous>, transform_indices = @transform_1, window_bounds = array<i64: 1, 16>}, {pipeline_mode = #tpu.pipeline_mode<synchronous>, transform_indices = @transform_2, window_bounds = array<i64: 1, 16>}, {pipeline_mode = #tpu.pipeline_mode<synchronous>, transform_indices = @transform_3, window_bounds = array<i64: 4, 16>}, {transform_indices = @transform_4, window_bounds = array<i64: 4, 256>}]} {
    %c0 = arith.constant 0 : index
    %c0_0 = arith.constant 0 : index
    %0 = vector.load %arg1[%c0, %c0_0] : memref<256x16xf32, #tpu.memory_space<vmem>>, vector<256x16xf32>
    %cst = arith.constant dense<0.000000e+00> : vector<256xf32>
    %1 = vector.multi_reduction <add>, %0, %cst [1] : vector<256x16xf32> to vector<256xf32>
    %2 = vector.shape_cast %1 : vector<256xf32> to vector<256x1xf32>
    %cst_1 = arith.constant 1.600000e+01 : f32
    %3 = vector.broadcast %cst_1 : f32 to vector<256x1xf32>
    %4 = arith.divf %2, %3 : vector<256x1xf32>
    %5 = vector.broadcast %4 : vector<256x1xf32> to vector<256x16xf32>
    %6 = arith.subf %0, %5 : vector<256x16xf32>
    %7 = arith.mulf %6, %6 : vector<256x16xf32>
    %cst_2 = arith.constant dense<0.000000e+00> : vector<256xf32>
    %8 = vector.multi_reduction <add>, %7, %cst_2 [1] : vector<256x16xf32> to vector<256xf32>
    %9 = vector.shape_cast %8 : vector<256xf32> to vector<256x1xf32>
    %cst_3 = arith.constant 1.600000e+01 : f32
    %10 = vector.broadcast %cst_3 : f32 to vector<256x1xf32>
    %11 = arith.divf %9, %10 : vector<256x1xf32>
    %12 = vector.broadcast %4 : vector<256x1xf32> to vector<256x16xf32>
    %13 = arith.subf %0, %12 : vector<256x16xf32>
    %cst_4 = arith.constant 9.99999974E-6 : f32
    %14 = vector.broadcast %cst_4 : f32 to vector<256x1xf32>
    %15 = arith.addf %11, %14 : vector<256x1xf32>
    %16 = math.rsqrt %15 : vector<256x1xf32>
    %17 = vector.broadcast %16 : vector<256x1xf32> to vector<256x16xf32>
    %18 = arith.mulf %13, %17 : vector<256x16xf32>
    %c0_5 = arith.constant 0 : index
    %c0_6 = arith.constant 0 : index
    %19 = vector.load %arg2[%c0_5, %c0_6] : memref<1x16xf32, #tpu.memory_space<vmem>>, vector<1x16xf32>
    %20 = vector.broadcast %19 : vector<1x16xf32> to vector<256x16xf32>
    %21 = arith.mulf %18, %20 : vector<256x16xf32>
    %c0_7 = arith.constant 0 : index
    %c0_8 = arith.constant 0 : index
    %22 = vector.load %arg3[%c0_7, %c0_8] : memref<1x16xf32, #tpu.memory_space<vmem>>, vector<1x16xf32>
    %23 = vector.broadcast %22 : vector<1x16xf32> to vector<256x16xf32>
    %24 = arith.addf %21, %23 : vector<256x16xf32>
    %c0_9 = arith.constant 0 : index
    %c0_10 = arith.constant 0 : index
    %25 = vector.load %arg4[%c0_9, %c0_10] : memref<4x16xbf16, #tpu.memory_space<vmem>>, vector<4x16xbf16>
    %26 = arith.truncf %24 : vector<256x16xf32> to vector<256x16xbf16>
    %cst_11 = arith.constant dense<0.000000e+00> : vector<4x256xf32>
    %27 = tpu.matmul %25, %26, %cst_11 {dimension_numbers = #tpu.dot_dimension_numbers<[1], [1], [0], [0], [0, 0, 1, 0], [], []>} : vector<4x16xbf16>, vector<256x16xbf16>, vector<4x256xf32> -> vector<4x256xf32>
    %28 = arith.truncf %27 : vector<4x256xf32> to vector<4x256xbf16>
    %c0_12 = arith.constant 0 : index
    %c0_13 = arith.constant 0 : index
    %29 = vector.load %arg5[%c0_12, %c0_13] : memref<4x256xbf16, #tpu.memory_space<vmem>>, vector<4x256xbf16>
    tpu.vector_store %arg5[%c0_12, %c0_13], %28 {strides = array<i32>} : memref<4x256xbf16, #tpu.memory_space<vmem>>, vector<4x256xbf16>,
    return
  }
  func.func @transform_0(%arg0: i32) -> (i32, i32) {
    %c0_i32 = arith.constant 0 : i32
    %c0_i32_0 = arith.constant 0 : i32
    return %arg0, %c0_i32 : i32, i32
  }
  func.func @transform_1(%arg0: i32) -> (i32, i32) {
    %c0_i32 = arith.constant 0 : i32
    %c0_i32_0 = arith.constant 0 : i32
    %c0_i32_1 = arith.constant 0 : i32
    return %c0_i32, %c0_i32_0 : i32, i32
  }
  func.func @transform_2(%arg0: i32) -> (i32, i32) {
    %c0_i32 = arith.constant 0 : i32
    %c0_i32_0 = arith.constant 0 : i32
    %c0_i32_1 = arith.constant 0 : i32
    return %c0_i32, %c0_i32_0 : i32, i32
  }
  func.func @transform_3(%arg0: i32) -> (i32, i32) {
    %c0_i32 = arith.constant 0 : i32
    %c0_i32_0 = arith.constant 0 : i32
    %c0_i32_1 = arith.constant 0 : i32
    return %c0_i32, %c0_i32_0 : i32, i32
  }
  func.func @transform_4(%arg0: i32) -> (i32, i32) {
    %c0_i32 = arith.constant 0 : i32
    %c0_i32_0 = arith.constant 0 : i32
    return %c0_i32, %arg0 : i32, i32
  }
}

</mosaic_0001>

<llo_original>
// kernel: tpu_custom_call.1
$region0: #{tpu_custom_call.1}
  #allocation0 [shape = 'u32[]', space=smem, size = 0x4, offset = 0x4, fixed_abs, tag = 'smem constant byte address 0x4 - core index']
  #allocation1 [shape = 'u32[144,128]{1,0:T(1,128)}', space=vmem, size = 0x12000, scoped, tag = 'internal scratch']
  %s0 = inlined_call_operand.hbm [shape: f32[8,128], index: 0, kind: input, shape index: {}]
  %s1 = inlined_call_operand.hbm [shape: f32[16,128], index: 1, kind: input, shape index: {}]
  %s2 = inlined_call_operand.hbm [shape: f32[16,128], index: 2, kind: output, shape index: {}]
  %s3 = sld [smem:[#allocation0]]
  $region49: #{tpu_custom_call.1} parent=0
    _
  %s5 = ssub.s32 1, %s3
  %s6 = scalar_select 0, %s5, %s3
  $region1: #{tpu_custom_call.1} parent=0
    #allocation2 [shape = 'u8[4096]{0}', space=vmem, size = 0x1000, scoped, tag = 'input window, operand 0, single buffered']
    #allocation3 [shape = 's32[2]{0}', space=sflag, size = 0x8, scoped, tag = 'scoped memory for tpu_custom_call.1']
    #allocation4 [shape = 's32[2]{0}', space=sflag, size = 0x8, scoped, tag = 'scoped memory for tpu_custom_call.1']
    #allocation5 [shape = 'u8[8192]{0}', space=vmem, size = 0x2000, scoped, tag = 'input window, operand 1']
    #allocation6 [shape = 's32[2]{0}', space=sflag, size = 0x8, scoped, tag = 'scoped memory for tpu_custom_call.1']
    #allocation7 [shape = 'u8[8192]{0}', space=vmem, size = 0x2000, scoped, tag = 'output window, operand 0']
    %7 = vsyncpa [#allocation3], 0
    %8 = vsyncpa [#allocation6], 0
    %s9 = scalar_lea.sflag [#allocation6], 1
    %10 = vsyncpa %s9, 0
    %11 = vsyncpa [#allocation4], 0
    %s12 = scalar_lea.sflag [#allocation4], 1
    %13 = vsyncpa %s12, 0
    loop: start=0, step=1, limit=4
    $region2: #{tpu_custom_call.1} parent=1 // loop_pre_header
      _
    $region3: #{tpu_custom_call.1} parent=1 // loop_header
      %s15 = sphi 0, %s19
      %p16 = scmp.ge.s32.totalorder %s15, 4
      %s23 = sphi 0, %s23
      %s25 = sphi 0, %s23
      %s26 = sphi 0, %s25
      %s40 = sphi 0, %s26
      %s46 = sphi 0, %s48
      %s49 = sphi 0, %s46
      %s50 = sphi 0, %s49
      %s66 = sphi 0, %s50
      %s72 = sphi 0, %s74
      %s75 = sphi 0, %s72
      %s76 = sphi 0, %s75
      %s92 = sphi 0, %s76
    $region4: #{tpu_custom_call.1} parent=1 // loop_header_branch
      %18 = sbr.rel (%p16) target = $region8
    $region5: #{tpu_custom_call.1} parent=1 // loop_body
      %s20 = ssub.s32 %s15, 1
      %s21 = ssub.s32 %s15, 2
      %s22 = sadd.s32 %s15, 1
      %s24 = sadd.s32 %s23, 1
      %p27 = scmp.eq.s32.totalorder %s15, 1
      %p28 = scmp.ne.s32.totalorder %s23, %s25
      %p29 = scmp.eq.s32.totalorder %s15, 0
      %p30 = por %p28, %p29
      %p31 = scmp.ne.s32.totalorder %s23, %s25
      %p32 = scmp.eq.s32.totalorder %s20, 1
      %p33 = por %p31, %p32
      %p34 = scmp.ne.s32.totalorder %s25, %s26
      %p35 = scmp.eq.s32.totalorder %s20, 0
      %p36 = por %p34, %p35
      %p37 = scmp.ne.s32.totalorder %s25, %s26
      %p38 = scmp.eq.s32.totalorder %s21, 1
      %p39 = por %p37, %p38
      %p41 = scmp.ne.s32.totalorder %s26, %s40
      %p42 = scmp.eq.s32.totalorder %s21, 0
      %p43 = por %p41, %p42
      %s44 = ssub.s32 %s15, %s22
      %p45 = scmp.eq.s32.totalorder %s44, 0
      %s47 = sadd.s32 %s46, 1
      %s48 = scalar_select %p45, %s46, %s47
      %p51 = pneg %p45
      %p52 = scmp.eq.s32.totalorder %s15, 1
      %p53 = por %p51, %p52
      %p54 = scmp.ne.s32.totalorder %s46, %s49
      %p55 = scmp.eq.s32.totalorder %s15, 0
      %p56 = por %p54, %p55
      %p57 = scmp.ne.s32.totalorder %s46, %s49
      %p58 = scmp.eq.s32.totalorder %s20, 1
      %p59 = por %p57, %p58
      %p60 = scmp.ne.s32.totalorder %s49, %s50
      %p61 = scmp.eq.s32.totalorder %s20, 0
      %p62 = por %p60, %p61
      %p63 = scmp.ne.s32.totalorder %s49, %s50
      %p64 = scmp.eq.s32.totalorder %s21, 1
      %p65 = por %p63, %p64
      %p67 = scmp.ne.s32.totalorder %s50, %s66
      %p68 = scmp.eq.s32.totalorder %s21, 0
      %p69 = por %p67, %p68
      %s70 = ssub.s32 %s15, %s22
      %p71 = scmp.eq.s32.totalorder %s70, 0
      %s73 = sadd.s32 %s72, 1
      %s74 = scalar_select %p71, %s72, %s73
      %p77 = pneg %p71
      %p78 = scmp.eq.s32.totalorder %s15, 1
      %p79 = por %p77, %p78
      %p80 = scmp.ne.s32.totalorder %s72, %s75
      %p81 = scmp.eq.s32.totalorder %s15, 0
      %p82 = por %p80, %p81
      %p83 = scmp.ne.s32.totalorder %s72, %s75
      %p84 = scmp.eq.s32.totalorder %s20, 1
      %p85 = por %p83, %p84
      %p86 = scmp.ne.s32.totalorder %s75, %s76
      %p87 = scmp.eq.s32.totalorder %s20, 0
      %p88 = por %p86, %p87
      %p89 = scmp.ne.s32.totalorder %s75, %s76
      %p90 = scmp.eq.s32.totalorder %s21, 1
      %p91 = por %p89, %p90
      %p93 = scmp.ne.s32.totalorder %s76, %s92
      %p94 = scmp.eq.s32.totalorder %s21, 0
      %p95 = por %p93, %p94
      %p96 = scmp.le.s32.totalorder 1, %s15
      %p97 = scmp.lt.s32.totalorder %s15, 3
      %p98 = pnand %p96, %p97
      %p99 = pneg %p98
      // Predicated region
      $region9: #{tpu_custom_call.1} parent=5 // pred_check
        _
      $region10: #{tpu_custom_call.1} parent=5 // pred_check_branch
        %101 = sbr.rel (%p98) target = $region12
      $region11: #{tpu_custom_call.1} parent=5 // pred_region
        %s102 = ssub.s32 %s15, 1
        // Predicated region
        $region13: #{tpu_custom_call.1} parent=11 // pred_check
          %p103 = pneg %p36
        $region14: #{tpu_custom_call.1} parent=11 // pred_check_branch
          %105 = sbr.rel (%p103) target = $region16
        $region15: #{tpu_custom_call.1} parent=11 // pred_region
          %s107 = ssub.s32 128, 128
          %108 = vsyncadd [#allocation3], %s107
          %s110 = sshll.u32 [#allocation2], 4
          %s111 = int_to_ptr.vmem [resolvable:$true] %s110
          %113 = dma.hbm_to_vmem [thread:$0]  %s0, 128, %s111, [#allocation3]
        $region16: #{tpu_custom_call.1} parent=11 // pred_fallthru
          _
      $region12: #{tpu_custom_call.1} parent=5 // pred_fallthru
        _
      %p114 = scmp.lt.s32.totalorder %s15, 2
      // Predicated region
      $region17: #{tpu_custom_call.1} parent=5 // pred_check
        %p115 = pneg %p114
      $region18: #{tpu_custom_call.1} parent=5 // pred_check_branch
        %117 = sbr.rel (%p115) target = $region20
      $region19: #{tpu_custom_call.1} parent=5 // pred_region
        // Predicated region
        $region21: #{tpu_custom_call.1} parent=19 // pred_check
          %p118 = pneg %p56
        $region22: #{tpu_custom_call.1} parent=19 // pred_check_branch
          %120 = sbr.rel (%p118) target = $region24
        $region23: #{tpu_custom_call.1} parent=19 // pred_region
          %s121 = sand.u32 %s46, 1
          %s122 = scalar_lea.sflag [#allocation6], %s121
          %s123 = sand.u32 %s46, 1
          %s124 = smul.addr %s123, 8
          %s125 = scalar_lea.vmem [#allocation5], %s124
          %s127 = ssub.s32 128, 128
          %128 = vsyncadd %s122, %s127
          %s129 = smul.addr %s15, 128
          %s130 = scalar_lea.hbm %s1, %s129
          %s132 = sshll.u32 %s125, 4
          %s133 = int_to_ptr.vmem [resolvable:$true] %s132
          %135 = dma.hbm_to_vmem [thread:$0]  %s130, 128, %s133, %s122
        $region24: #{tpu_custom_call.1} parent=19 // pred_fallthru
          _
      $region20: #{tpu_custom_call.1} parent=5 // pred_fallthru
        _
      %p136 = scmp.le.s32.totalorder 1, %s15
      %p137 = scmp.lt.s32.totalorder %s15, 3
      %p138 = pnand %p136, %p137
      %p139 = pneg %p138
      // Predicated region
      $region25: #{tpu_custom_call.1} parent=5 // pred_check
        _
      $region26: #{tpu_custom_call.1} parent=5 // pred_check_branch
        %141 = sbr.rel (%p138) target = $region28
      $region27: #{tpu_custom_call.1} parent=5 // pred_region
        %s142 = ssub.s32 %s15, 1
        // Predicated region
        $region29: #{tpu_custom_call.1} parent=27 // pred_check
          %p143 = pneg %p36
        $region30: #{tpu_custom_call.1} parent=27 // pred_check_branch
          %145 = sbr.rel (%p143) target = $region32
        $region31: #{tpu_custom_call.1} parent=27 // pred_region
          %146 = dma.done [#allocation3], 128
        $region32: #{tpu_custom_call.1} parent=27 // pred_fallthru
          _
        %s147 = sand.u32 %s49, 1
        %s148 = scalar_lea.sflag [#allocation6], %s147
        %s149 = sand.u32 %s49, 1
        %s150 = smul.addr %s149, 8
        %s151 = scalar_lea.vmem [#allocation5], %s150
        // Predicated region
        $region33: #{tpu_custom_call.1} parent=27 // pred_check
          %p152 = pneg %p62
        $region34: #{tpu_custom_call.1} parent=27 // pred_check_branch
          %154 = sbr.rel (%p152) target = $region36
        $region35: #{tpu_custom_call.1} parent=27 // pred_region
          %155 = dma.done %s148, 128
        $region36: #{tpu_custom_call.1} parent=27 // pred_fallthru
          _
        %p156 = pneg %p36
        %p157 = pneg %p33
        %s158 = sand.u32 %s49, 1
        %s159 = scalar_lea.sflag [#allocation6], %s158
        %s160 = sand.u32 %s49, 1
        %s161 = smul.addr %s160, 8
        %s162 = scalar_lea.vmem [#allocation5], %s161
        %p163 = pneg %p62
        %p164 = pneg %p59
        %p165 = pneg %p88
        %p166 = pneg %p85
        %s167 = sand.u32 %s75, 1
        %s168 = scalar_lea.sflag [#allocation4], %s167
        %s169 = sand.u32 %s75, 1
        %s170 = smul.addr %s169, 8
        %s171 = scalar_lea.vmem [#allocation7], %s170
        %v172 = vld [vmem:[%s151] sm:$0xff]
        %v173 = vld [vmem:[#allocation2] sm:$0xff]
        %v174 = vadd.f32 %v172, %v173
        %175 = vst [vmem:[%s171] sm:$0xff] %v174
        %s176 = sand.u32 %s75, 1
        %s177 = scalar_lea.sflag [#allocation4], %s176
        %s178 = sand.u32 %s75, 1
        %s179 = smul.addr %s178, 8
        %s180 = scalar_lea.vmem [#allocation7], %s179
        // Predicated region
        $region37: #{tpu_custom_call.1} parent=27 // pred_check
          %p181 = pneg %p85
        $region38: #{tpu_custom_call.1} parent=27 // pred_check_branch
          %183 = sbr.rel (%p181) target = $region40
        $region39: #{tpu_custom_call.1} parent=27 // pred_region
          %s185 = ssub.s32 128, 128
          %186 = vsyncadd %s177, %s185
          %s187 = smul.addr %s20, 128
          %s188 = scalar_lea.hbm %s2, %s187
          %s190 = sshll.u32 %s180, 4
          %s191 = int_to_ptr.vmem [resolvable:$true] %s190
          %193 = dma.vmem_to_hbm [thread:$0]  %s191, 128, %s188, %s177
        $region40: #{tpu_custom_call.1} parent=27 // pred_fallthru
          _
      $region28: #{tpu_custom_call.1} parent=5 // pred_fallthru
        _
      %p194 = scmp.le.s32.totalorder 2, %s15
      // Predicated region
      $region41: #{tpu_custom_call.1} parent=5 // pred_check
        %p195 = pneg %p194
      $region42: #{tpu_custom_call.1} parent=5 // pred_check_branch
        %197 = sbr.rel (%p195) target = $region44
      $region43: #{tpu_custom_call.1} parent=5 // pred_region
        %s198 = ssub.s32 %s15, 2
        // Predicated region
        $region45: #{tpu_custom_call.1} parent=43 // pred_check
          %p199 = pneg %p91
        $region46: #{tpu_custom_call.1} parent=43 // pred_check_branch
          %201 = sbr.rel (%p199) target = $region48
        $region47: #{tpu_custom_call.1} parent=43 // pred_region
          %s202 = sand.u32 %s76, 1
          %s203 = scalar_lea.sflag [#allocation4], %s202
          %s204 = sand.u32 %s76, 1
          %s205 = smul.addr %s204, 8
          %s206 = scalar_lea.vmem [#allocation7], %s205
          %207 = dma.done %s203, 128
        $region48: #{tpu_custom_call.1} parent=43 // pred_fallthru
          _
      $region44: #{tpu_custom_call.1} parent=5 // pred_fallthru
        _
    $region6: #{tpu_custom_call.1} parent=1 // loop_footer
      %s19 = sadd.s32 1, %s15
    $region7: #{tpu_custom_call.1} parent=1 // loop_footer_branch
      %14 = sbr.rel target = $region3
    $region8: #{tpu_custom_call.1} parent=1 // loop_exit
      _
    %208 = vsyncpa [#allocation3], 1
    %s209 = scalar_lea.sflag [#allocation3], 1
    %210 = vsyncpa %s209, 1
    %211 = vsyncpa [#allocation6], 1
    %s212 = scalar_lea.sflag [#allocation6], 1
    %213 = vsyncpa %s212, 1
    %214 = vsyncpa [#allocation4], 1
    %s215 = scalar_lea.sflag [#allocation4], 1
    %216 = vsyncpa %s215, 1

// kernel: tpu_custom_call.1
$region0: #{tpu_custom_call.1}
  #allocation0 [shape = 'u32[]', space=smem, size = 0x4, offset = 0x4, fixed_abs, tag = 'smem constant byte address 0x4 - core index']
  #allocation1 [shape = 'u32[144,128]{1,0:T(1,128)}', space=vmem, size = 0x12000, scoped, tag = 'internal scratch']
  %s0 = inlined_call_operand.vmem [shape: f32[256,16], index: 0, kind: input, shape index: {}]
  %s1 = inlined_call_operand.vmem [shape: f32[1,16], index: 1, kind: input, shape index: {}]
  %s2 = inlined_call_operand.vmem [shape: f32[1,16], index: 2, kind: input, shape index: {}]
  %s3 = inlined_call_operand.vmem [shape: bf16[4,16], index: 3, kind: input, shape index: {}]
  %s4 = inlined_call_operand.hbm [shape: bf16[4,256], index: 4, kind: output, shape index: {}]
  %s5 = sld [smem:[#allocation0]]
  $region26: #{tpu_custom_call.1} parent=0
    _
  %s7 = ssub.s32 1, %s5
  %s8 = scalar_select 0, %s7, %s5
  $region1: #{tpu_custom_call.1} parent=0
    #allocation2 [shape = 'u8[2048]{0}', space=vmem, size = 0x800, scoped, tag = 'output window, operand 0, single buffered']
    #allocation3 [shape = 's32[1]{0}', space=sflag, size = 0x4, scoped, tag = 'scoped memory for tpu_custom_call.1']
    %9 = vsyncpa [#allocation3], 0
    // Predicated region
    $region2: #{tpu_custom_call.1} parent=1 // pred_check
      _
    $region3: #{tpu_custom_call.1} parent=1 // pred_check_branch
      %11 = sbr.rel (0) target = $region5
    $region4: #{tpu_custom_call.1} parent=1 // pred_region
      _
    $region5: #{tpu_custom_call.1} parent=1 // pred_fallthru
      _
    // Predicated region
    $region6: #{tpu_custom_call.1} parent=1 // pred_check
      _
    $region7: #{tpu_custom_call.1} parent=1 // pred_check_branch
      %13 = sbr.rel (0) target = $region9
    $region8: #{tpu_custom_call.1} parent=1 // pred_region
      _
    $region9: #{tpu_custom_call.1} parent=1 // pred_fallthru
      _
    // Predicated region
    $region10: #{tpu_custom_call.1} parent=1 // pred_check
      _
    $region11: #{tpu_custom_call.1} parent=1 // pred_check_branch
      %15 = sbr.rel (0) target = $region13
    $region12: #{tpu_custom_call.1} parent=1 // pred_region
      _
    $region13: #{tpu_custom_call.1} parent=1 // pred_fallthru
      _
    // Predicated region
    $region14: #{tpu_custom_call.1} parent=1 // pred_check
      _
    $region15: #{tpu_custom_call.1} parent=1 // pred_check_branch
      %17 = sbr.rel (0) target = $region17
    $region16: #{tpu_custom_call.1} parent=1 // pred_region
      _
    $region17: #{tpu_custom_call.1} parent=1 // pred_fallthru
      _
    %v19 = vld [vmem:[%s0] sm:$0xff]
    %v20 = vld [vmem:[%s0 + $0x8] sm:$0xff]
    %v21 = vld [vmem:[%s0 + $0x10] sm:$0xff]
    %v22 = vld [vmem:[%s0 + $0x18] sm:$0xff]
    %v23 = vld [vmem:[%s0 + $0x20] sm:$0xff]
    %v24 = vld [vmem:[%s0 + $0x28] sm:$0xff]
    %v25 = vld [vmem:[%s0 + $0x30] sm:$0xff]
    %v26 = vld [vmem:[%s0 + $0x38] sm:$0xff]
    %v27 = vld [vmem:[%s0 + $0x40] sm:$0xff]
    %v28 = vld [vmem:[%s0 + $0x48] sm:$0xff]
    %v29 = vld [vmem:[%s0 + $0x50] sm:$0xff]
    %v30 = vld [vmem:[%s0 + $0x58] sm:$0xff]
    %v31 = vld [vmem:[%s0 + $0x60] sm:$0xff]
    %v32 = vld [vmem:[%s0 + $0x68] sm:$0xff]
    %v33 = vld [vmem:[%s0 + $0x70] sm:$0xff]
    %v34 = vld [vmem:[%s0 + $0x78] sm:$0xff]
    %v35 = vld [vmem:[%s0 + $0x80] sm:$0xff]
    %v36 = vld [vmem:[%s0 + $0x88] sm:$0xff]
    %v37 = vld [vmem:[%s0 + $0x90] sm:$0xff]
    %v38 = vld [vmem:[%s0 + $0x98] sm:$0xff]
    %v39 = vld [vmem:[%s0 + $0xa0] sm:$0xff]
    %v40 = vld [vmem:[%s0 + $0xa8] sm:$0xff]
    %v41 = vld [vmem:[%s0 + $0xb0] sm:$0xff]
    %v42 = vld [vmem:[%s0 + $0xb8] sm:$0xff]
    %v43 = vld [vmem:[%s0 + $0xc0] sm:$0xff]
    %v44 = vld [vmem:[%s0 + $0xc8] sm:$0xff]
    %v45 = vld [vmem:[%s0 + $0xd0] sm:$0xff]
    %v46 = vld [vmem:[%s0 + $0xd8] sm:$0xff]
    %v47 = vld [vmem:[%s0 + $0xe0] sm:$0xff]
    %v48 = vld [vmem:[%s0 + $0xe8] sm:$0xff]
    %v49 = vld [vmem:[%s0 + $0xf0] sm:$0xff]
    %v50 = vld [vmem:[%s0 + $0xf8] sm:$0xff]
    %vm51 = vcmask 130048
    %v52 = vsel %vm51, %v19, 0.0
    %53 = vadd.xlane.f32.xlu0 %v52
    %v54 = vpop.xlane.xlu0 %53
    %v55 = vsel %vm51, %v20, 0.0
    %56 = vadd.xlane.f32.xlu0 %v55
    %v57 = vpop.xlane.xlu0 %56
    %v58 = vsel %vm51, %v21, 0.0
    %59 = vadd.xlane.f32.xlu0 %v58
    %v60 = vpop.xlane.xlu0 %59
    %v61 = vsel %vm51, %v22, 0.0
    %62 = vadd.xlane.f32.xlu0 %v61
    %v63 = vpop.xlane.xlu0 %62
    %v64 = vsel %vm51, %v23, 0.0
    %65 = vadd.xlane.f32.xlu0 %v64
    %v66 = vpop.xlane.xlu0 %65
    %v67 = vsel %vm51, %v24, 0.0
    %68 = vadd.xlane.f32.xlu0 %v67
    %v69 = vpop.xlane.xlu0 %68
    %v70 = vsel %vm51, %v25, 0.0
    %71 = vadd.xlane.f32.xlu0 %v70
    %v72 = vpop.xlane.xlu0 %71
    %v73 = vsel %vm51, %v26, 0.0
    %74 = vadd.xlane.f32.xlu0 %v73
    %v75 = vpop.xlane.xlu0 %74
    %v76 = vsel %vm51, %v27, 0.0
    %77 = vadd.xlane.f32.xlu0 %v76
    %v78 = vpop.xlane.xlu0 %77
    %v79 = vsel %vm51, %v28, 0.0
    %80 = vadd.xlane.f32.xlu0 %v79
    %v81 = vpop.xlane.xlu0 %80
    %v82 = vsel %vm51, %v29, 0.0
    %83 = vadd.xlane.f32.xlu0 %v82
    %v84 = vpop.xlane.xlu0 %83
    %v85 = vsel %vm51, %v30, 0.0
    %86 = vadd.xlane.f32.xlu0 %v85
    %v87 = vpop.xlane.xlu0 %86
    %v88 = vsel %vm51, %v31, 0.0
    %89 = vadd.xlane.f32.xlu0 %v88
    %v90 = vpop.xlane.xlu0 %89
    %v91 = vsel %vm51, %v32, 0.0
    %92 = vadd.xlane.f32.xlu0 %v91
    %v93 = vpop.xlane.xlu0 %92
    %v94 = vsel %vm51, %v33, 0.0
    %95 = vadd.xlane.f32.xlu0 %v94
    %v96 = vpop.xlane.xlu0 %95
    %v97 = vsel %vm51, %v34, 0.0
    %98 = vadd.xlane.f32.xlu0 %v97
    %v99 = vpop.xlane.xlu0 %98
    %v100 = vsel %vm51, %v35, 0.0
    %101 = vadd.xlane.f32.xlu0 %v100
    %v102 = vpop.xlane.xlu0 %101
    %v103 = vsel %vm51, %v36, 0.0
    %104 = vadd.xlane.f32.xlu0 %v103
    %v105 = vpop.xlane.xlu0 %104
    %v106 = vsel %vm51, %v37, 0.0
    %107 = vadd.xlane.f32.xlu0 %v106
    %v108 = vpop.xlane.xlu0 %107
    %v109 = vsel %vm51, %v38, 0.0
    %110 = vadd.xlane.f32.xlu0 %v109
    %v111 = vpop.xlane.xlu0 %110
    %v112 = vsel %vm51, %v39, 0.0
    %113 = vadd.xlane.f32.xlu0 %v112
    %v114 = vpop.xlane.xlu0 %113
    %v115 = vsel %vm51, %v40, 0.0
    %116 = vadd.xlane.f32.xlu0 %v115
    %v117 = vpop.xlane.xlu0 %116
    %v118 = vsel %vm51, %v41, 0.0
    %119 = vadd.xlane.f32.xlu0 %v118
    %v120 = vpop.xlane.xlu0 %119
    %v121 = vsel %vm51, %v42, 0.0
    %122 = vadd.xlane.f32.xlu0 %v121
    %v123 = vpop.xlane.xlu0 %122
    %v124 = vsel %vm51, %v43, 0.0
    %125 = vadd.xlane.f32.xlu0 %v124
    %v126 = vpop.xlane.xlu0 %125
    %v127 = vsel %vm51, %v44, 0.0
    %128 = vadd.xlane.f32.xlu0 %v127
    %v129 = vpop.xlane.xlu0 %128
    %v130 = vsel %vm51, %v45, 0.0
    %131 = vadd.xlane.f32.xlu0 %v130
    %v132 = vpop.xlane.xlu0 %131
    %v133 = vsel %vm51, %v46, 0.0
    %134 = vadd.xlane.f32.xlu0 %v133
    %v135 = vpop.xlane.xlu0 %134
    %v136 = vsel %vm51, %v47, 0.0
    %137 = vadd.xlane.f32.xlu0 %v136
    %v138 = vpop.xlane.xlu0 %137
    %v139 = vsel %vm51, %v48, 0.0
    %140 = vadd.xlane.f32.xlu0 %v139
    %v141 = vpop.xlane.xlu0 %140
    %v142 = vsel %vm51, %v49, 0.0
    %143 = vadd.xlane.f32.xlu0 %v142
    %v144 = vpop.xlane.xlu0 %143
    %v145 = vsel %vm51, %v50, 0.0
    %146 = vadd.xlane.f32.xlu0 %v145
    %v147 = vpop.xlane.xlu0 %146
    %v148 = vrcp.pop 16.0
    %v149 = vmul.f32 %v54, %v148
    %v150 = vmul.f32 %v57, %v148
    %v151 = vmul.f32 %v60, %v148
    %v152 = vmul.f32 %v63, %v148
    %v153 = vmul.f32 %v66, %v148
    %v154 = vmul.f32 %v69, %v148
    %v155 = vmul.f32 %v72, %v148
    %v156 = vmul.f32 %v75, %v148
    %v157 = vmul.f32 %v78, %v148
    %v158 = vmul.f32 %v81, %v148
    %v159 = vmul.f32 %v84, %v148
    %v160 = vmul.f32 %v87, %v148
    %v161 = vmul.f32 %v90, %v148
    %v162 = vmul.f32 %v93, %v148
    %v163 = vmul.f32 %v96, %v148
    %v164 = vmul.f32 %v99, %v148
    %v165 = vmul.f32 %v102, %v148
    %v166 = vmul.f32 %v105, %v148
    %v167 = vmul.f32 %v108, %v148
    %v168 = vmul.f32 %v111, %v148
    %v169 = vmul.f32 %v114, %v148
    %v170 = vmul.f32 %v117, %v148
    %v171 = vmul.f32 %v120, %v148
    %v172 = vmul.f32 %v123, %v148
    %v173 = vmul.f32 %v126, %v148
    %v174 = vmul.f32 %v129, %v148
    %v175 = vmul.f32 %v132, %v148
    %v176 = vmul.f32 %v135, %v148
    %v177 = vmul.f32 %v138, %v148
    %v178 = vmul.f32 %v141, %v148
    %v179 = vmul.f32 %v144, %v148
    %v180 = vmul.f32 %v147, %v148
    %v181 = vsub.f32 %v19, %v149
    %v182 = vsub.f32 %v20, %v150
    %v183 = vsub.f32 %v21, %v151
    %v184 = vsub.f32 %v22, %v152
    %v185 = vsub.f32 %v23, %v153
    %v186 = vsub.f32 %v24, %v154
    %v187 = vsub.f32 %v25, %v155
    %v188 = vsub.f32 %v26, %v156
    %v189 = vsub.f32 %v27, %v157
    %v190 = vsub.f32 %v28, %v158
    %v191 = vsub.f32 %v29, %v159
    %v192 = vsub.f32 %v30, %v160
    %v193 = vsub.f32 %v31, %v161
    %v194 = vsub.f32 %v32, %v162
    %v195 = vsub.f32 %v33, %v163
    %v196 = vsub.f32 %v34, %v164
    %v197 = vsub.f32 %v35, %v165
    %v198 = vsub.f32 %v36, %v166
    %v199 = vsub.f32 %v37, %v167
    %v200 = vsub.f32 %v38, %v168
    %v201 = vsub.f32 %v39, %v169
    %v202 = vsub.f32 %v40, %v170
    %v203 = vsub.f32 %v41, %v171
    %v204 = vsub.f32 %v42, %v172
    %v205 = vsub.f32 %v43, %v173
    %v206 = vsub.f32 %v44, %v174
    %v207 = vsub.f32 %v45, %v175
    %v208 = vsub.f32 %v46, %v176
    %v209 = vsub.f32 %v47, %v177
    %v210 = vsub.f32 %v48, %v178
    %v211 = vsub.f32 %v49, %v179
    %v212 = vsub.f32 %v50, %v180
    %v213 = vmul.f32 %v181, %v181
    %v214 = vmul.f32 %v182, %v182
    %v215 = vmul.f32 %v183, %v183
    %v216 = vmul.f32 %v184, %v184
    %v217 = vmul.f32 %v185, %v185
    %v218 = vmul.f32 %v186, %v186
    %v219 = vmul.f32 %v187, %v187
    %v220 = vmul.f32 %v188, %v188
    %v221 = vmul.f32 %v189, %v189
    %v222 = vmul.f32 %v190, %v190
    %v223 = vmul.f32 %v191, %v191
    %v224 = vmul.f32 %v192, %v192
    %v225 = vmul.f32 %v193, %v193
    %v226 = vmul.f32 %v194, %v194
    %v227 = vmul.f32 %v195, %v195
    %v228 = vmul.f32 %v196, %v196
    %v229 = vmul.f32 %v197, %v197
    %v230 = vmul.f32 %v198, %v198
    %v231 = vmul.f32 %v199, %v199
    %v232 = vmul.f32 %v200, %v200
    %v233 = vmul.f32 %v201, %v201
    %v234 = vmul.f32 %v202, %v202
    %v235 = vmul.f32 %v203, %v203
    %v236 = vmul.f32 %v204, %v204
    %v237 = vmul.f32 %v205, %v205
    %v238 = vmul.f32 %v206, %v206
    %v239 = vmul.f32 %v207, %v207
    %v240 = vmul.f32 %v208, %v208
    %v241 = vmul.f32 %v209, %v209
    %v242 = vmul.f32 %v210, %v210
    %v243 = vmul.f32 %v211, %v211
    %v244 = vmul.f32 %v212, %v212
    %v245 = vsel %vm51, %v213, 0.0
    %246 = vadd.xlane.f32.xlu0 %v245
    %v247 = vpop.xlane.xlu0 %246
    %v248 = vsel %vm51, %v214, 0.0
    %249 = vadd.xlane.f32.xlu0 %v248
    %v250 = vpop.xlane.xlu0 %249
    %v251 = vsel %vm51, %v215, 0.0
    %252 = vadd.xlane.f32.xlu0 %v251
    %v253 = vpop.xlane.xlu0 %252
    %v254 = vsel %vm51, %v216, 0.0
    %255 = vadd.xlane.f32.xlu0 %v254
    %v256 = vpop.xlane.xlu0 %255
    %v257 = vsel %vm51, %v217, 0.0
    %258 = vadd.xlane.f32.xlu0 %v257
    %v259 = vpop.xlane.xlu0 %258
    %v260 = vsel %vm51, %v218, 0.0
    %261 = vadd.xlane.f32.xlu0 %v260
    %v262 = vpop.xlane.xlu0 %261
    %v263 = vsel %vm51, %v219, 0.0
    %264 = vadd.xlane.f32.xlu0 %v263
    %v265 = vpop.xlane.xlu0 %264
    %v266 = vsel %vm51, %v220, 0.0
    %267 = vadd.xlane.f32.xlu0 %v266
    %v268 = vpop.xlane.xlu0 %267
    %v269 = vsel %vm51, %v221, 0.0
    %270 = vadd.xlane.f32.xlu0 %v269
    %v271 = vpop.xlane.xlu0 %270
    %v272 = vsel %vm51, %v222, 0.0
    %273 = vadd.xlane.f32.xlu0 %v272
    %v274 = vpop.xlane.xlu0 %273
    %v275 = vsel %vm51, %v223, 0.0
    %276 = vadd.xlane.f32.xlu0 %v275
    %v277 = vpop.xlane.xlu0 %276
    %v278 = vsel %vm51, %v224, 0.0
    %279 = vadd.xlane.f32.xlu0 %v278
    %v280 = vpop.xlane.xlu0 %279
    %v281 = vsel %vm51, %v225, 0.0
    %282 = vadd.xlane.f32.xlu0 %v281
    %v283 = vpop.xlane.xlu0 %282
    %v284 = vsel %vm51, %v226, 0.0
    %285 = vadd.xlane.f32.xlu0 %v284
    %v286 = vpop.xlane.xlu0 %285
    %v287 = vsel %vm51, %v227, 0.0
    %288 = vadd.xlane.f32.xlu0 %v287
    %v289 = vpop.xlane.xlu0 %288
    %v290 = vsel %vm51, %v228, 0.0
    %291 = vadd.xlane.f32.xlu0 %v290
    %v292 = vpop.xlane.xlu0 %291
    %v293 = vsel %vm51, %v229, 0.0
    %294 = vadd.xlane.f32.xlu0 %v293
    %v295 = vpop.xlane.xlu0 %294
    %v296 = vsel %vm51, %v230, 0.0
    %297 = vadd.xlane.f32.xlu0 %v296
    %v298 = vpop.xlane.xlu0 %297
    %v299 = vsel %vm51, %v231, 0.0
    %300 = vadd.xlane.f32.xlu0 %v299
    %v301 = vpop.xlane.xlu0 %300
    %v302 = vsel %vm51, %v232, 0.0
    %303 = vadd.xlane.f32.xlu0 %v302
    %v304 = vpop.xlane.xlu0 %303
    %v305 = vsel %vm51, %v233, 0.0
    %306 = vadd.xlane.f32.xlu0 %v305
    %v307 = vpop.xlane.xlu0 %306
    %v308 = vsel %vm51, %v234, 0.0
    %309 = vadd.xlane.f32.xlu0 %v308
    %v310 = vpop.xlane.xlu0 %309
    %v311 = vsel %vm51, %v235, 0.0
    %312 = vadd.xlane.f32.xlu0 %v311
    %v313 = vpop.xlane.xlu0 %312
    %v314 = vsel %vm51, %v236, 0.0
    %315 = vadd.xlane.f32.xlu0 %v314
    %v316 = vpop.xlane.xlu0 %315
    %v317 = vsel %vm51, %v237, 0.0
    %318 = vadd.xlane.f32.xlu0 %v317
    %v319 = vpop.xlane.xlu0 %318
    %v320 = vsel %vm51, %v238, 0.0
    %321 = vadd.xlane.f32.xlu0 %v320
    %v322 = vpop.xlane.xlu0 %321
    %v323 = vsel %vm51, %v239, 0.0
    %324 = vadd.xlane.f32.xlu0 %v323
    %v325 = vpop.xlane.xlu0 %324
    %v326 = vsel %vm51, %v240, 0.0
    %327 = vadd.xlane.f32.xlu0 %v326
    %v328 = vpop.xlane.xlu0 %327
    %v329 = vsel %vm51, %v241, 0.0
    %330 = vadd.xlane.f32.xlu0 %v329
    %v331 = vpop.xlane.xlu0 %330
    %v332 = vsel %vm51, %v242, 0.0
    %333 = vadd.xlane.f32.xlu0 %v332
    %v334 = vpop.xlane.xlu0 %333
    %v335 = vsel %vm51, %v243, 0.0
    %336 = vadd.xlane.f32.xlu0 %v335
    %v337 = vpop.xlane.xlu0 %336
    %v338 = vsel %vm51, %v244, 0.0
    %339 = vadd.xlane.f32.xlu0 %v338
    %v340 = vpop.xlane.xlu0 %339
    %v341 = vmul.f32 %v247, %v148
    %v342 = vmul.f32 %v250, %v148
    %v343 = vmul.f32 %v253, %v148
    %v344 = vmul.f32 %v256, %v148
    %v345 = vmul.f32 %v259, %v148
    %v346 = vmul.f32 %v262, %v148
    %v347 = vmul.f32 %v265, %v148
    %v348 = vmul.f32 %v268, %v148
    %v349 = vmul.f32 %v271, %v148
    %v350 = vmul.f32 %v274, %v148
    %v351 = vmul.f32 %v277, %v148
    %v352 = vmul.f32 %v280, %v148
    %v353 = vmul.f32 %v283, %v148
    %v354 = vmul.f32 %v286, %v148
    %v355 = vmul.f32 %v289, %v148
    %v356 = vmul.f32 %v292, %v148
    %v357 = vmul.f32 %v295, %v148
    %v358 = vmul.f32 %v298, %v148
    %v359 = vmul.f32 %v301, %v148
    %v360 = vmul.f32 %v304, %v148
    %v361 = vmul.f32 %v307, %v148
    %v362 = vmul.f32 %v310, %v148
    %v363 = vmul.f32 %v313, %v148
    %v364 = vmul.f32 %v316, %v148
    %v365 = vmul.f32 %v319, %v148
    %v366 = vmul.f32 %v322, %v148
    %v367 = vmul.f32 %v325, %v148
    %v368 = vmul.f32 %v328, %v148
    %v369 = vmul.f32 %v331, %v148
    %v370 = vmul.f32 %v334, %v148
    %v371 = vmul.f32 %v337, %v148
    %v372 = vmul.f32 %v340, %v148
    %v373 = vadd.f32 %v341, 1e-05
    %v374 = vadd.f32 %v342, 1e-05
    %v375 = vadd.f32 %v343, 1e-05
    %v376 = vadd.f32 %v344, 1e-05
    %v377 = vadd.f32 %v345, 1e-05
    %v378 = vadd.f32 %v346, 1e-05
    %v379 = vadd.f32 %v347, 1e-05
    %v380 = vadd.f32 %v348, 1e-05
    %v381 = vadd.f32 %v349, 1e-05
    %v382 = vadd.f32 %v350, 1e-05
    %v383 = vadd.f32 %v351, 1e-05
    %v384 = vadd.f32 %v352, 1e-05
    %v385 = vadd.f32 %v353, 1e-05
    %v386 = vadd.f32 %v354, 1e-05
    %v387 = vadd.f32 %v355, 1e-05
    %v388 = vadd.f32 %v356, 1e-05
    %v389 = vadd.f32 %v357, 1e-05
    %v390 = vadd.f32 %v358, 1e-05
    %v391 = vadd.f32 %v359, 1e-05
    %v392 = vadd.f32 %v360, 1e-05
    %v393 = vadd.f32 %v361, 1e-05
    %v394 = vadd.f32 %v362, 1e-05
    %v395 = vadd.f32 %v363, 1e-05
    %v396 = vadd.f32 %v364, 1e-05
    %v397 = vadd.f32 %v365, 1e-05
    %v398 = vadd.f32 %v366, 1e-05
    %v399 = vadd.f32 %v367, 1e-05
    %v400 = vadd.f32 %v368, 1e-05
    %v401 = vadd.f32 %v369, 1e-05
    %v402 = vadd.f32 %v370, 1e-05
    %v403 = vadd.f32 %v371, 1e-05
    %v404 = vadd.f32 %v372, 1e-05
    %v405 = vrsqrt.pop %v373
    %v406 = vrsqrt.pop %v374
    %v407 = vrsqrt.pop %v375
    %v408 = vrsqrt.pop %v376
    %v409 = vrsqrt.pop %v377
    %v410 = vrsqrt.pop %v378
    %v411 = vrsqrt.pop %v379
    %v412 = vrsqrt.pop %v380
    %v413 = vrsqrt.pop %v381
    %v414 = vrsqrt.pop %v382
    %v415 = vrsqrt.pop %v383
    %v416 = vrsqrt.pop %v384
    %v417 = vrsqrt.pop %v385
    %v418 = vrsqrt.pop %v386
    %v419 = vrsqrt.pop %v387
    %v420 = vrsqrt.pop %v388
    %v421 = vrsqrt.pop %v389
    %v422 = vrsqrt.pop %v390
    %v423 = vrsqrt.pop %v391
    %v424 = vrsqrt.pop %v392
    %v425 = vrsqrt.pop %v393
    %v426 = vrsqrt.pop %v394
    %v427 = vrsqrt.pop %v395
    %v428 = vrsqrt.pop %v396
    %v429 = vrsqrt.pop %v397
    %v430 = vrsqrt.pop %v398
    %v431 = vrsqrt.pop %v399
    %v432 = vrsqrt.pop %v400
    %v433 = vrsqrt.pop %v401
    %v434 = vrsqrt.pop %v402
    %v435 = vrsqrt.pop %v403
    %v436 = vrsqrt.pop %v404
    %v437 = vmul.f32 %v181, %v405
    %v438 = vmul.f32 %v182, %v406
    %v439 = vmul.f32 %v183, %v407
    %v440 = vmul.f32 %v184, %v408
    %v441 = vmul.f32 %v185, %v409
    %v442 = vmul.f32 %v186, %v410
    %v443 = vmul.f32 %v187, %v411
    %v444 = vmul.f32 %v188, %v412
    %v445 = vmul.f32 %v189, %v413
    %v446 = vmul.f32 %v190, %v414
    %v447 = vmul.f32 %v191, %v415
    %v448 = vmul.f32 %v192, %v416
    %v449 = vmul.f32 %v193, %v417
    %v450 = vmul.f32 %v194, %v418
    %v451 = vmul.f32 %v195, %v419
    %v452 = vmul.f32 %v196, %v420
    %v453 = vmul.f32 %v197, %v421
    %v454 = vmul.f32 %v198, %v422
    %v455 = vmul.f32 %v199, %v423
    %v456 = vmul.f32 %v200, %v424
    %v457 = vmul.f32 %v201, %v425
    %v458 = vmul.f32 %v202, %v426
    %v459 = vmul.f32 %v203, %v427
    %v460 = vmul.f32 %v204, %v428
    %v461 = vmul.f32 %v205, %v429
    %v462 = vmul.f32 %v206, %v430
    %v463 = vmul.f32 %v207, %v431
    %v464 = vmul.f32 %v208, %v432
    %v465 = vmul.f32 %v209, %v433
    %v466 = vmul.f32 %v210, %v434
    %v467 = vmul.f32 %v211, %v435
    %v468 = vmul.f32 %v212, %v436
    %v469 = vld [vmem:[%s1] sm:$0x1]
    %v471 = vlaneseq
    %v472 = vshrl.u32 %v471, 7
    %v473 = vsub.s32 0, %v472
    %v474 = vrot.slane %v469, %v473
    %v476 = vmul.f32 %v437, %v474
    %v477 = vmul.f32 %v438, %v474
    %v478 = vmul.f32 %v439, %v474
    %v479 = vmul.f32 %v440, %v474
    %v480 = vmul.f32 %v441, %v474
    %v481 = vmul.f32 %v442, %v474
    %v482 = vmul.f32 %v443, %v474
    %v483 = vmul.f32 %v444, %v474
    %v484 = vmul.f32 %v445, %v474
    %v485 = vmul.f32 %v446, %v474
    %v486 = vmul.f32 %v447, %v474
    %v487 = vmul.f32 %v448, %v474
    %v488 = vmul.f32 %v449, %v474
    %v489 = vmul.f32 %v450, %v474
    %v490 = vmul.f32 %v451, %v474
    %v491 = vmul.f32 %v452, %v474
    %v492 = vmul.f32 %v453, %v474
    %v493 = vmul.f32 %v454, %v474
    %v494 = vmul.f32 %v455, %v474
    %v495 = vmul.f32 %v456, %v474
    %v496 = vmul.f32 %v457, %v474
    %v497 = vmul.f32 %v458, %v474
    %v498 = vmul.f32 %v459, %v474
    %v499 = vmul.f32 %v460, %v474
    %v500 = vmul.f32 %v461, %v474
    %v501 = vmul.f32 %v462, %v474
    %v502 = vmul.f32 %v463, %v474
    %v503 = vmul.f32 %v464, %v474
    %v504 = vmul.f32 %v465, %v474
    %v505 = vmul.f32 %v466, %v474
    %v506 = vmul.f32 %v467, %v474
    %v507 = vmul.f32 %v468, %v474
    %v508 = vld [vmem:[%s2] sm:$0x1]
    %v510 = vlaneseq
    %v511 = vshrl.u32 %v510, 7
    %v512 = vsub.s32 0, %v511
    %v513 = vrot.slane %v508, %v512
    %v515 = vadd.f32 %v476, %v513
    %v516 = vadd.f32 %v477, %v513
    %v517 = vadd.f32 %v478, %v513
    %v518 = vadd.f32 %v479, %v513
    %v519 = vadd.f32 %v480, %v513
    %v520 = vadd.f32 %v481, %v513
    %v521 = vadd.f32 %v482, %v513
    %v522 = vadd.f32 %v483, %v513
    %v523 = vadd.f32 %v484, %v513
    %v524 = vadd.f32 %v485, %v513
    %v525 = vadd.f32 %v486, %v513
    %v526 = vadd.f32 %v487, %v513
    %v527 = vadd.f32 %v488, %v513
    %v528 = vadd.f32 %v489, %v513
    %v529 = vadd.f32 %v490, %v513
    %v530 = vadd.f32 %v491, %v513
    %v531 = vadd.f32 %v492, %v513
    %v532 = vadd.f32 %v493, %v513
    %v533 = vadd.f32 %v494, %v513
    %v534 = vadd.f32 %v495, %v513
    %v535 = vadd.f32 %v496, %v513
    %v536 = vadd.f32 %v497, %v513
    %v537 = vadd.f32 %v498, %v513
    %v538 = vadd.f32 %v499, %v513
    %v539 = vadd.f32 %v500, %v513
    %v540 = vadd.f32 %v501, %v513
    %v541 = vadd.f32 %v502, %v513
    %v542 = vadd.f32 %v503, %v513
    %v543 = vadd.f32 %v504, %v513
    %v544 = vadd.f32 %v505, %v513
    %v545 = vadd.f32 %v506, %v513
    %v546 = vadd.f32 %v507, %v513
    %v547 = vld [vmem:[%s3] sm:$0x3]
    %v548 = vpack.c.bf16 %v516, %v515
    %v549 = vpack.c.bf16 %v518, %v517
    %v550 = vpack.c.bf16 %v520, %v519
    %v551 = vpack.c.bf16 %v522, %v521
    %v552 = vpack.c.bf16 %v524, %v523
    %v553 = vpack.c.bf16 %v526, %v525
    %v554 = vpack.c.bf16 %v528, %v527
    %v555 = vpack.c.bf16 %v530, %v529
    %v556 = vpack.c.bf16 %v532, %v531
    %v557 = vpack.c.bf16 %v534, %v533
    %v558 = vpack.c.bf16 %v536, %v535
    %v559 = vpack.c.bf16 %v538, %v537
    %v560 = vpack.c.bf16 %v540, %v539
    %v561 = vpack.c.bf16 %v542, %v541
    %v562 = vpack.c.bf16 %v544, %v543
    %v563 = vpack.c.bf16 %v546, %v545
    %v565 = vsel %vm51, %v547, 0
    %v568 = vsel %vm51, %v548, 0
    %v571 = vsel %vm51, %v549, 0
    %v574 = vsel %vm51, %v550, 0
    %v577 = vsel %vm51, %v551, 0
    %v580 = vsel %vm51, %v552, 0
    %v583 = vsel %vm51, %v553, 0
    %v586 = vsel %vm51, %v554, 0
    %v589 = vsel %vm51, %v555, 0
    %v592 = vsel %vm51, %v556, 0
    %v595 = vsel %vm51, %v557, 0
    %v598 = vsel %vm51, %v558, 0
    %v601 = vsel %vm51, %v559, 0
    %v604 = vsel %vm51, %v560, 0
    %v607 = vsel %vm51, %v561, 0
    %v610 = vsel %vm51, %v562, 0
    %v613 = vsel %vm51, %v563, 0
    %615 = vmatprep.subr.bf16.mxu0 0
    %616 = vmatpush1.bf16.xpose.msra.mxu0 %v568
    %617 = vmatprep.subr.bf16.mxu0 0
    %618 = vmatpush1.bf16.xpose.msra.mxu0 %v571
    %619 = vmatprep.subr.bf16.mxu0 0
    %620 = vmatpush1.bf16.xpose.msra.mxu0 %v574
    %621 = vmatprep.subr.bf16.mxu0 0
    %622 = vmatpush1.bf16.xpose.msra.mxu0 %v577
    %623 = vmatprep.subr.bf16.mxu0 0
    %624 = vmatpush1.bf16.xpose.msra.mxu0 %v580
    %625 = vmatprep.subr.bf16.mxu0 0
    %626 = vmatpush1.bf16.xpose.msra.mxu0 %v583
    %627 = vmatprep.subr.bf16.mxu0 0
    %628 = vmatpush1.bf16.xpose.msra.mxu0 %v586
    %629 = vmatprep.subr.bf16.mxu0 0
    %630 = vmatpush1.bf16.xpose.msra.mxu0 %v589
    %631 = vmatprep.subr.bf16.mxu0 0
    %632 = vmatpush1.bf16.xpose.msra.mxu0 %v592
    %633 = vmatprep.subr.bf16.mxu0 0
    %634 = vmatpush1.bf16.xpose.msra.mxu0 %v595
    %635 = vmatprep.subr.bf16.mxu0 0
    %636 = vmatpush1.bf16.xpose.msra.mxu0 %v598
    %637 = vmatprep.subr.bf16.mxu0 0
    %638 = vmatpush1.bf16.xpose.msra.mxu0 %v601
    %639 = vmatprep.subr.bf16.mxu0 0
    %640 = vmatpush1.bf16.xpose.msra.mxu0 %v604
    %641 = vmatprep.subr.bf16.mxu0 0
    %642 = vmatpush1.bf16.xpose.msra.mxu0 %v607
    %643 = vmatprep.subr.bf16.mxu0 0
    %644 = vmatpush1.bf16.xpose.msra.mxu0 %v610
    %645 = vmatprep.subr.bf16.mxu0 0
    %646 = vmatpush1.bf16.xpose.msra.mxu0 %v613
    %647 = vmatprep.mubr.bf16.mxu0 0
    %648 = vmatmul.mubr.bf16.gmra.mrb[0].mxu0 %v565
    %v649 = vpop.f32.mrb[0].mxu0
    %v650 = vadd.f32 0.0, %v649
    %v651 = vpop.f32.mrb[0].mxu0
    %v652 = vadd.f32 0.0, %v651
    %v653 = vpop.f32.mrb[0].mxu0
    %v654 = vpop.f32.mrb[0].mxu0
    %655 = vdwg.mxu0
    %v656 = vpack.c.bf16 %v650, %v650
    %v657 = vpack.c.bf16 %v652, %v652
    %v660 = vcombine.low %v656, %v657
    %v662 = vunpack.c.l.s4 1983009808
    %v663 = vunpack.c.0.s8 %v662
    %v664 = vlaneseq
    %v665 = vshrl.u32 %v664, 7
    %v666 = vsub.s32 %v663, %v665
    %v667 = vrot.slane %v660, %v666
    %669 = vst [vmem:[#allocation2] sm:$0xf] %v667
    // Predicated region
    $region18: #{tpu_custom_call.1} parent=1 // pred_check
      _
    $region19: #{tpu_custom_call.1} parent=1 // pred_check_branch
      %671 = sbr.rel (0) target = $region21
    $region20: #{tpu_custom_call.1} parent=1 // pred_region
      %s673 = ssub.s32 64, 64
      %674 = vsyncadd [#allocation3], %s673
      %s676 = sshll.u32 [#allocation2], 4
      %s677 = int_to_ptr.vmem [resolvable:$true] %s676
      %679 = dma.vmem_to_hbm [thread:$0]  %s677, 64, %s4, [#allocation3]
    $region21: #{tpu_custom_call.1} parent=1 // pred_fallthru
      _
    // Predicated region
    $region22: #{tpu_custom_call.1} parent=1 // pred_check
      _
    $region23: #{tpu_custom_call.1} parent=1 // pred_check_branch
      %681 = sbr.rel (0) target = $region25
    $region24: #{tpu_custom_call.1} parent=1 // pred_region
      %682 = dma.done [#allocation3], 64
    $region25: #{tpu_custom_call.1} parent=1 // pred_fallthru
      _
    %683 = vsyncpa [#allocation3], 1

</llo_original>
